<compile_context>
chip_gen: v7x
topology: tpu7x:2x2x1
jax: 0.10.0
libtpu: 0.0.40
codegen_flags: <defaults>
</compile_context>

<pallas_src>
import functools

import jax
import jax.numpy as jnp
from jax import lax
from jax.experimental import pallas as pl
from jax.experimental.pallas import tpu as pltpu

LN_EPS = 1e-5


def _round_up(a, b):
    return (a + b - 1) // b * b


def _vmem_capacity_bytes():
    try:
        return int(pltpu.get_tpu_info().vmem_capacity_bytes)
    except Exception:
        return 64 * 1024 * 1024  # conservative fallback (v7x per-TC capacity)


def resnet_block_kernel(x_ref, gamma_ref, beta_ref, w1_ref, b1_ref, w2_ref, b2_ref,
                        o_ref, xn_ref, acc_ref):
    # Grid: (row tiles [parallel], 4H chunks [arbitrary]).
    j = pl.program_id(1)

    @pl.when(j == 0)
    def _():
        # LayerNorm once per row-tile; stats via sum / sum-of-squares so the two
        # cross-lane reductions are independent.
        x = x_ref[...].astype(jnp.float32)
        inv_f = 1.0 / x_ref.shape[-1]
        s1 = jnp.sum(x, axis=-1, keepdims=True)
        s2 = jnp.sum(x * x, axis=-1, keepdims=True)
        mean = s1 * inv_f
        var = s2 * inv_f - mean * mean
        xn = (x - mean) * lax.rsqrt(var + LN_EPS)
        xn = xn * gamma_ref[...].astype(jnp.float32) + beta_ref[...].astype(jnp.float32)
        xn_ref[...] = xn.astype(jnp.bfloat16)          # cached bf16 LN output
        acc_ref[...] = jnp.zeros_like(acc_ref)

    # Linear(F -> 4H chunk) + bias + ReLU: bf16 operands, f32 accumulation on the MXU.
    h = jnp.dot(xn_ref[...], w1_ref[...], preferred_element_type=jnp.float32)
    h = jnp.maximum(h + b1_ref[...].astype(jnp.float32), 0.0)

    # Linear(4H chunk -> H): accumulate the partial contraction into f32 scratch.
    acc_ref[...] += jnp.dot(h.astype(jnp.bfloat16), w2_ref[...],
                            preferred_element_type=jnp.float32)

    @pl.when(j == pl.num_programs(1) - 1)
    def _():
        out = acc_ref[...] + b2_ref[...].astype(jnp.float32)
        # Residual: re-read the raw input tile (still VMEM-resident) — short live range.
        o_ref[...] = (out + x_ref[...].astype(jnp.float32)).astype(o_ref.dtype)


@functools.partial(jax.jit, static_argnames=("tile_m", "tile_h4"))
def resnet_block(x, gamma, beta, w1, b1, w2, b2, *, tile_m=None, tile_h4=2048):
    """x: [..., F]; returns same shape. Requires H == F (residual add)."""
    orig_shape = x.shape
    F = orig_shape[-1]
    H4 = w1.shape[1]
    H = w2.shape[1]
    assert H == F, "residual add requires hidden_dim == in_features"

    x2d = x.reshape(-1, F)
    n_rows = x2d.shape[0]
    bpe = x2d.dtype.itemsize

    vmem_cap = _vmem_capacity_bytes()

    # Row-tile size: VMEM-capacity-aware default, clamped (8-aligned) for small inputs,
    # and split so the "parallel" row axis has >= 2 steps (v7x has 2 TensorCores).
    if tile_m is None:
        tile_m = 512 if vmem_cap >= 96 * 1024 * 1024 else 256
    tm = min(tile_m, _round_up(n_rows, 8))
    tm = _round_up(max(tm, 8), 8)
    if pl.cdiv(n_rows, tm) < 2 and n_rows >= 16:
        tm = _round_up(pl.cdiv(n_rows, 2), 8)
    grid_m = pl.cdiv(n_rows, tm)

    # 4H chunking (contraction dim of the 2nd GEMM).  Weights are zero-padded along 4H
    # if needed so out-of-range chunks contribute exactly zero to the accumulation.
    tn = _round_up(min(tile_h4, _round_up(H4, 128)), 128)
    h4_pad = _round_up(H4, tn)
    grid_n = h4_pad // tn

    w1b = w1.astype(jnp.bfloat16)
    w2b = w2.astype(jnp.bfloat16)
    b1f = b1
    if h4_pad != H4:
        w1b = jnp.pad(w1b, ((0, 0), (0, h4_pad - H4)))
        b1f = jnp.pad(b1, ((0, 0), (0, h4_pad - H4)))
        w2b = jnp.pad(w2b, ((0, h4_pad - H4), (0, 0)))

    # Constant-index operands only need a single pipeline buffer.
    resident = pl.Buffered(buffer_count=1)
    # Weight chunks: double-buffer while streaming over the 4H axis; single-buffer when
    # the whole 4H axis is one resident block.
    w_mode = resident if grid_n == 1 else None
    w_bufs = 1 if grid_n == 1 else 2

    in_specs = [
        pl.BlockSpec((tm, F), lambda i, j: (i, 0)),                            # x rows
        pl.BlockSpec((1, F), lambda i, j: (0, 0), pipeline_mode=resident),     # gamma
        pl.BlockSpec((1, F), lambda i, j: (0, 0), pipeline_mode=resident),     # beta
        pl.BlockSpec((F, tn), lambda i, j: (0, j), pipeline_mode=w_mode),      # W1 chunk
        pl.BlockSpec((1, tn), lambda i, j: (0, j), pipeline_mode=w_mode),      # b1 chunk
        pl.BlockSpec((tn, H), lambda i, j: (j, 0), pipeline_mode=w_mode),      # W2 chunk
        pl.BlockSpec((1, H), lambda i, j: (0, 0), pipeline_mode=resident),     # b2
    ]
    out_specs = pl.BlockSpec((tm, H), lambda i, j: (i, 0))

    # Device-aware VMEM budget: sized from the actual blocks + scratch, 1.35x slack,
    # capped at physical capacity minus ~8 MiB headroom.
    vmem_est = (2 * tm * F * bpe                       # x tiles (double buffered)
                + 2 * tm * H * bpe                     # out tiles
                + w_bufs * (F * tn + tn * H) * 2       # bf16 weight chunks
                + w_bufs * tn * 4                      # b1 chunks
                + (2 * F + H) * 4                      # gamma / beta / b2
                + tm * F * 2                           # bf16 LN-output scratch
                + tm * H * 4                           # f32 accumulator scratch
                + tm * tn * 4)                         # f32 h intermediate
    vmem_limit = int(min(max(int(1.35 * vmem_est), 32 * 1024 * 1024),
                         vmem_cap - 8 * 1024 * 1024))

    cost = pl.CostEstimate(
        flops=2 * n_rows * F * H4 + 2 * n_rows * H4 * H,
        transcendentals=n_rows,
        bytes_accessed=(n_rows * (F + H) * bpe
                        + (F * H4 + H4 * H) * 2
                        + (2 * F + H4 + H) * 4),
    )

    out = pl.pallas_call(
        resnet_block_kernel,
        out_shape=jax.ShapeDtypeStruct((n_rows, H), x.dtype),
        grid_spec=pltpu.PrefetchScalarGridSpec(
            num_scalar_prefetch=0,
            grid=(grid_m, grid_n),
            in_specs=in_specs,
            out_specs=out_specs,
            scratch_shapes=[pltpu.VMEM((tm, F), jnp.bfloat16),   # cached LN output
                            pltpu.VMEM((tm, H), jnp.float32)],   # accumulator
        ),
        compiler_params=pltpu.CompilerParams(
            dimension_semantics=("parallel", "arbitrary"),
            vmem_limit_bytes=vmem_limit,
        ),
        cost_estimate=cost,
    )(x2d, gamma, beta, w1b, b1f, w2b, b2)

    return out.reshape(orig_shape)


def init_params(key, in_features, hidden_dim, dtype=jnp.float32):
    """Deterministic init mirroring nn.Linear defaults (uniform +/- 1/sqrt(fan_in))."""
    k1, k2, k3, k4 = jax.random.split(key, 4)
    h4 = 4 * hidden_dim
    gamma = jnp.ones((1, in_features), dtype)
    beta = jnp.zeros((1, in_features), dtype)
    lim1 = 1.0 / (in_features ** 0.5)
    w1 = jax.random.uniform(k1, (in_features, h4), dtype, -lim1, lim1)
    b1 = jax.random.uniform(k2, (1, h4), dtype, -lim1, lim1)
    lim2 = 1.0 / (h4 ** 0.5)
    w2 = jax.random.uniform(k3, (h4, hidden_dim), dtype, -lim2, lim2)
    b2 = jax.random.uniform(k4, (1, hidden_dim), dtype, -lim2, lim2)
    return gamma, beta, w1, b1, w2, b2


def resnet_block_ref(x, gamma, beta, w1, b1, w2, b2):
    """Pure-JAX reference with the same bf16-operand / f32-accumulate matmul recipe."""
    xf = x.astype(jnp.float32)
    mean = jnp.mean(xf, axis=-1, keepdims=True)
    var = jnp.mean((xf - mean) ** 2, axis=-1, keepdims=True)
    xn = (xf - mean) * lax.rsqrt(var + LN_EPS)
    xn = xn * gamma[0].astype(jnp.float32) + beta[0].astype(jnp.float32)
    h = jnp.dot(xn.astype(jnp.bfloat16), w1.astype(jnp.bfloat16),
                preferred_element_type=jnp.float32) + b1[0].astype(jnp.float32)
    h = jnp.maximum(h, 0.0)
    out = jnp.dot(h.astype(jnp.bfloat16), w2.astype(jnp.bfloat16),
                  preferred_element_type=jnp.float32) + b2[0].astype(jnp.float32)
    return (out + xf).astype(x.dtype)


if __name__ == "__main__":
    key = jax.random.PRNGKey(0)
    k_x, k_x2, k_p = jax.random.split(key, 3)

    # Lane-dense demo shape (feature axis = 128).
    batch, seq = 2, 8
    in_features = 128
    hidden_dim = 128   # must equal in_features for the residual add

    params = init_params(k_p, in_features, hidden_dim)

    # Case 1: small input (rows=16 -> two 8-row tiles so the parallel axis has 2 steps).
    x = jax.random.normal(k_x, (batch, seq, in_features), jnp.float32)
    out = jax.block_until_ready(resnet_block(x, *params))
    ref = resnet_block_ref(x, *params)
    assert out.shape == x.shape
    assert jnp.allclose(out, ref, atol=1e-2, rtol=1e-2), "mismatch vs reference (case 1)"

    # Case 2: rows not a multiple of the tile (exercises the masked partial-tile path,
    # no host-side padding of x).
    x2 = jax.random.normal(k_x2, (3, 100, in_features), jnp.float32)   # 300 rows
    out2 = jax.block_until_ready(resnet_block(x2, *params))
    ref2 = resnet_block_ref(x2, *params)
    assert out2.shape == x2.shape
    assert jnp.allclose(out2, ref2, atol=1e-2, rtol=1e-2), "mismatch vs reference (case 2)"

    print("KERNEL_OK")
</pallas_src>

<mosaic_0001>
module attributes {stable_mosaic.version = 11 : i64} {
  func.func @resnet_block_kernel(%arg0: i32, %arg1: i32, %arg2: memref<8x128xf32, #tpu.memory_space<vmem>>, %arg3: memref<1x128xf32, #tpu.memory_space<vmem>>, %arg4: memref<1x128xf32, #tpu.memory_space<vmem>>, %arg5: memref<128x512xbf16, #tpu.memory_space<vmem>>, %arg6: memref<1x512xf32, #tpu.memory_space<vmem>>, %arg7: memref<512x128xbf16, #tpu.memory_space<vmem>>, %arg8: memref<1x128xf32, #tpu.memory_space<vmem>>, %arg9: memref<8x128xf32, #tpu.memory_space<vmem>>, %arg10: memref<8x128xbf16, #tpu.memory_space<vmem>>, %arg11: memref<8x128xf32, #tpu.memory_space<vmem>>) attributes {dimension_semantics = [#tpu.dimension_semantics<parallel>, #tpu.dimension_semantics<arbitrary>], iteration_bounds = array<i64: 2, 1>, scalar_prefetch = 0 : i64, scratch_operands = 2 : i64, tpu.core_type = #tpu.core_type<tc>, window_params = [{transform_indices = @transform_0, window_bounds = array<i64: 8, 128>}, {pipeline_mode = #tpu.pipeline_mode<synchronous>, transform_indices = @transform_1, window_bounds = array<i64: 1, 128>}, {pipeline_mode = #tpu.pipeline_mode<synchronous>, transform_indices = @transform_2, window_bounds = array<i64: 1, 128>}, {pipeline_mode = #tpu.pipeline_mode<synchronous>, transform_indices = @transform_3, window_bounds = array<i64: 128, 512>}, {pipeline_mode = #tpu.pipeline_mode<synchronous>, transform_indices = @transform_4, window_bounds = array<i64: 1, 512>}, {pipeline_mode = #tpu.pipeline_mode<synchronous>, transform_indices = @transform_5, window_bounds = array<i64: 512, 128>}, {pipeline_mode = #tpu.pipeline_mode<synchronous>, transform_indices = @transform_6, window_bounds = array<i64: 1, 128>}, {transform_indices = @transform_7, window_bounds = array<i64: 8, 128>}]} {
    %c0_i32 = arith.constant 0 : i32
    %0 = arith.cmpi eq, %arg1, %c0_i32 : i32
    %1 = arith.extui %0 : i1 to i32
    %c0_i32_0 = arith.constant 0 : i32
    %2 = arith.cmpi ne, %1, %c0_i32_0 : i32
    scf.if %2 {
      %c0_16 = arith.constant 0 : index
      %c0_17 = arith.constant 0 : index
      %20 = vector.load %arg2[%c0_16, %c0_17] : memref<8x128xf32, #tpu.memory_space<vmem>>, vector<8x128xf32>
      %cst_18 = arith.constant dense<0.000000e+00> : vector<8xf32>
      %21 = vector.multi_reduction <add>, %20, %cst_18 [1] : vector<8x128xf32> to vector<8xf32>
      %22 = vector.shape_cast %21 : vector<8xf32> to vector<8x1xf32>
      %23 = arith.mulf %20, %20 : vector<8x128xf32>
      %cst_19 = arith.constant dense<0.000000e+00> : vector<8xf32>
      %24 = vector.multi_reduction <add>, %23, %cst_19 [1] : vector<8x128xf32> to vector<8xf32>
      %25 = vector.shape_cast %24 : vector<8xf32> to vector<8x1xf32>
      %cst_20 = arith.constant 7.812500e-03 : f32
      %26 = vector.broadcast %cst_20 : f32 to vector<8x1xf32>
      %27 = arith.mulf %22, %26 : vector<8x1xf32>
      %cst_21 = arith.constant 7.812500e-03 : f32
      %28 = vector.broadcast %cst_21 : f32 to vector<8x1xf32>
      %29 = arith.mulf %25, %28 : vector<8x1xf32>
      %30 = arith.mulf %27, %27 : vector<8x1xf32>
      %31 = arith.subf %29, %30 : vector<8x1xf32>
      %32 = vector.broadcast %27 : vector<8x1xf32> to vector<8x128xf32>
      %33 = arith.subf %20, %32 : vector<8x128xf32>
      %cst_22 = arith.constant 9.99999974E-6 : f32
      %34 = vector.broadcast %cst_22 : f32 to vector<8x1xf32>
      %35 = arith.addf %31, %34 : vector<8x1xf32>
      %36 = math.rsqrt %35 : vector<8x1xf32>
      %37 = vector.broadcast %36 : vector<8x1xf32> to vector<8x128xf32>
      %38 = arith.mulf %33, %37 : vector<8x128xf32>
      %c0_23 = arith.constant 0 : index
      %c0_24 = arith.constant 0 : index
      %39 = vector.load %arg3[%c0_23, %c0_24] : memref<1x128xf32, #tpu.memory_space<vmem>>, vector<1x128xf32>
      %40 = vector.broadcast %39 : vector<1x128xf32> to vector<8x128xf32>
      %41 = arith.mulf %38, %40 : vector<8x128xf32>
      %c0_25 = arith.constant 0 : index
      %c0_26 = arith.constant 0 : index
      %42 = vector.load %arg4[%c0_25, %c0_26] : memref<1x128xf32, #tpu.memory_space<vmem>>, vector<1x128xf32>
      %43 = vector.broadcast %42 : vector<1x128xf32> to vector<8x128xf32>
      %44 = arith.addf %41, %43 : vector<8x128xf32>
      %45 = arith.truncf %44 : vector<8x128xf32> to vector<8x128xbf16>
      %c0_27 = arith.constant 0 : index
      %c0_28 = arith.constant 0 : index
      %46 = vector.load %arg10[%c0_27, %c0_28] : memref<8x128xbf16, #tpu.memory_space<vmem>>, vector<8x128xbf16>
      tpu.vector_store %arg10[%c0_27, %c0_28], %45 {strides = array<i32>} : memref<8x128xbf16, #tpu.memory_space<vmem>>, vector<8x128xbf16>,
      %cst_29 = arith.constant 0.000000e+00 : f32
      %47 = vector.broadcast %cst_29 : f32 to vector<8x128xf32>
      %c0_30 = arith.constant 0 : index
      %c0_31 = arith.constant 0 : index
      %48 = vector.load %arg11[%c0_30, %c0_31] : memref<8x128xf32, #tpu.memory_space<vmem>>, vector<8x128xf32>
      tpu.vector_store %arg11[%c0_30, %c0_31], %47 {strides = array<i32>} : memref<8x128xf32, #tpu.memory_space<vmem>>, vector<8x128xf32>,
    } else {
    }
    %c0 = arith.constant 0 : index
    %c0_1 = arith.constant 0 : index
    %3 = vector.load %arg10[%c0, %c0_1] : memref<8x128xbf16, #tpu.memory_space<vmem>>, vector<8x128xbf16>
    %c0_2 = arith.constant 0 : index
    %c0_3 = arith.constant 0 : index
    %4 = vector.load %arg5[%c0_2, %c0_3] : memref<128x512xbf16, #tpu.memory_space<vmem>>, vector<128x512xbf16>
    %cst = arith.constant dense<0.000000e+00> : vector<8x512xf32>
    %5 = tpu.matmul %3, %4, %cst {dimension_numbers = #tpu.dot_dimension_numbers<[1], [0], [0], [1], [0, 0, 1, 1], [], []>} : vector<8x128xbf16>, vector<128x512xbf16>, vector<8x512xf32> -> vector<8x512xf32>
    %c0_4 = arith.constant 0 : index
    %c0_5 = arith.constant 0 : index
    %6 = vector.load %arg6[%c0_4, %c0_5] : memref<1x512xf32, #tpu.memory_space<vmem>>, vector<1x512xf32>
    %7 = vector.broadcast %6 : vector<1x512xf32> to vector<8x512xf32>
    %8 = arith.addf %5, %7 : vector<8x512xf32>
    %cst_6 = arith.constant 0.000000e+00 : f32
    %9 = vector.broadcast %cst_6 : f32 to vector<8x512xf32>
    %10 = arith.maximumf %8, %9 : vector<8x512xf32>
    %c0_7 = arith.constant 0 : index
    %c0_8 = arith.constant 0 : index
    %11 = vector.load %arg11[%c0_7, %c0_8] : memref<8x128xf32, #tpu.memory_space<vmem>>, vector<8x128xf32>
    %12 = arith.truncf %10 : vector<8x512xf32> to vector<8x512xbf16>
    %c0_9 = arith.constant 0 : index
    %c0_10 = arith.constant 0 : index
    %13 = vector.load %arg7[%c0_9, %c0_10] : memref<512x128xbf16, #tpu.memory_space<vmem>>, vector<512x128xbf16>
    %cst_11 = arith.constant dense<0.000000e+00> : vector<8x128xf32>
    %14 = tpu.matmul %12, %13, %cst_11 {dimension_numbers = #tpu.dot_dimension_numbers<[1], [0], [0], [1], [0, 0, 1, 1], [], []>} : vector<8x512xbf16>, vector<512x128xbf16>, vector<8x128xf32> -> vector<8x128xf32>
    %15 = arith.addf %11, %14 : vector<8x128xf32>
    %c0_12 = arith.constant 0 : index
    %c0_13 = arith.constant 0 : index
    %16 = vector.load %arg11[%c0_12, %c0_13] : memref<8x128xf32, #tpu.memory_space<vmem>>, vector<8x128xf32>
    tpu.vector_store %arg11[%c0_12, %c0_13], %15 {strides = array<i32>} : memref<8x128xf32, #tpu.memory_space<vmem>>, vector<8x128xf32>,
    %c0_i32_14 = arith.constant 0 : i32
    %17 = arith.cmpi eq, %arg1, %c0_i32_14 : i32
    %18 = arith.extui %17 : i1 to i32
    %c0_i32_15 = arith.constant 0 : i32
    %19 = arith.cmpi ne, %18, %c0_i32_15 : i32
    scf.if %19 {
      %c0_16 = arith.constant 0 : index
      %c0_17 = arith.constant 0 : index
      %20 = vector.load %arg11[%c0_16, %c0_17] : memref<8x128xf32, #tpu.memory_space<vmem>>, vector<8x128xf32>
      %c0_18 = arith.constant 0 : index
      %c0_19 = arith.constant 0 : index
      %21 = vector.load %arg8[%c0_18, %c0_19] : memref<1x128xf32, #tpu.memory_space<vmem>>, vector<1x128xf32>
      %22 = vector.broadcast %21 : vector<1x128xf32> to vector<8x128xf32>
      %23 = arith.addf %20, %22 : vector<8x128xf32>
      %c0_20 = arith.constant 0 : index
      %c0_21 = arith.constant 0 : index
      %24 = vector.load %arg2[%c0_20, %c0_21] : memref<8x128xf32, #tpu.memory_space<vmem>>, vector<8x128xf32>
      %25 = arith.addf %23, %24 : vector<8x128xf32>
      %c0_22 = arith.constant 0 : index
      %c0_23 = arith.constant 0 : index
      %26 = vector.load %arg9[%c0_22, %c0_23] : memref<8x128xf32, #tpu.memory_space<vmem>>, vector<8x128xf32>
      tpu.vector_store %arg9[%c0_22, %c0_23], %25 {strides = array<i32>} : memref<8x128xf32, #tpu.memory_space<vmem>>, vector<8x128xf32>,
    } else {
    }
    return
  }
  func.func @transform_0(%arg0: i32, %arg1: i32) -> (i32, i32) {
    %c0_i32 = arith.constant 0 : i32
    %c0_i32_0 = arith.constant 0 : i32
    return %arg0, %c0_i32 : i32, i32
  }
  func.func @transform_1(%arg0: i32, %arg1: i32) -> (i32, i32) {
    %c0_i32 = arith.constant 0 : i32
    %c0_i32_0 = arith.constant 0 : i32
    %c0_i32_1 = arith.constant 0 : i32
    return %c0_i32, %c0_i32_0 : i32, i32
  }
  func.func @transform_2(%arg0: i32, %arg1: i32) -> (i32, i32) {
    %c0_i32 = arith.constant 0 : i32
    %c0_i32_0 = arith.constant 0 : i32
    %c0_i32_1 = arith.constant 0 : i32
    return %c0_i32, %c0_i32_0 : i32, i32
  }
  func.func @transform_3(%arg0: i32, %arg1: i32) -> (i32, i32) {
    %c0_i32 = arith.constant 0 : i32
    %c0_i32_0 = arith.constant 0 : i32
    return %c0_i32, %arg1 : i32, i32
  }
  func.func @transform_4(%arg0: i32, %arg1: i32) -> (i32, i32) {
    %c0_i32 = arith.constant 0 : i32
    %c0_i32_0 = arith.constant 0 : i32
    return %c0_i32, %arg1 : i32, i32
  }
  func.func @transform_5(%arg0: i32, %arg1: i32) -> (i32, i32) {
    %c0_i32 = arith.constant 0 : i32
    %c0_i32_0 = arith.constant 0 : i32
    return %arg1, %c0_i32 : i32, i32
  }
  func.func @transform_6(%arg0: i32, %arg1: i32) -> (i32, i32) {
    %c0_i32 = arith.constant 0 : i32
    %c0_i32_0 = arith.constant 0 : i32
    %c0_i32_1 = arith.constant 0 : i32
    return %c0_i32, %c0_i32_0 : i32, i32
  }
  func.func @transform_7(%arg0: i32, %arg1: i32) -> (i32, i32) {
    %c0_i32 = arith.constant 0 : i32
    %c0_i32_0 = arith.constant 0 : i32
    return %arg0, %c0_i32 : i32, i32
  }
}

</mosaic_0001>

<llo_original>
// kernel: resnet_block.1
$region0: #{resnet_block.1}
  #allocation0 [shape = 'u32[]', space=smem, size = 0x4, offset = 0x4, fixed_abs, tag = 'smem constant byte address 0x4 - core index']
  #allocation1 [shape = 'u32[144,128]{1,0:T(1,128)}', space=vmem, size = 0x12000, scoped, tag = 'internal scratch']
  #allocation2 [shape = 'bf16[8,128]{1,0:T(8,128)(2,1)}', space=vmem, size = 0x800, scoped, tag = 'scratch operand']
  #allocation3 [shape = 'f32[8,128]{1,0:T(8,128)}', space=vmem, size = 0x1000, scoped, tag = 'scratch operand']
  %s0 = inlined_call_operand.vmem [shape: f32[16,128], index: 0, kind: input, shape index: {}]
  %s1 = inlined_call_operand.vmem [shape: f32[1,128], index: 1, kind: input, shape index: {}]
  %s2 = inlined_call_operand.vmem [shape: f32[1,128], index: 2, kind: input, shape index: {}]
  %s3 = inlined_call_operand.vmem [shape: bf16[128,512], index: 3, kind: input, shape index: {}]
  %s4 = inlined_call_operand.vmem [shape: f32[1,512], index: 4, kind: input, shape index: {}]
  %s5 = inlined_call_operand.vmem [shape: bf16[512,128], index: 5, kind: input, shape index: {}]
  %s6 = inlined_call_operand.vmem [shape: f32[1,128], index: 6, kind: input, shape index: {}]
  %s7 = inlined_call_operand.hbm [shape: f32[16,128], index: 7, kind: output, shape index: {}]
  %s8 = sld [smem:[#allocation0]]
  $region69: #{resnet_block.1} parent=0
    _
  %s10 = ssub.s32 1, %s8
  %s11 = scalar_select 0, %s10, %s8
  $region1: #{resnet_block.1} parent=0
    #allocation4 [shape = 'u8[8192]{0}', space=vmem, size = 0x2000, scoped, tag = 'output window, operand 0']
    #allocation5 [shape = 's32[2]{0}', space=sflag, size = 0x8, scoped, tag = 'scoped memory for resnet_block.1']
    %12 = vsyncpa [#allocation5], 0
    %s13 = scalar_lea.sflag [#allocation5], 1
    %14 = vsyncpa %s13, 0
    loop: start=0, step=1, limit=4
    $region2: #{resnet_block.1} parent=1 // loop_pre_header
      _
    $region3: #{resnet_block.1} parent=1 // loop_header
      %s16 = sphi 0, %s20
      %p17 = scmp.ge.s32.totalorder %s16, 4
      %s23 = sphi 0, %s35
      %s24 = sphi 0, %s31
      %s25 = sphi 0, %s23
      %s26 = sphi 0, %s24
      %s27 = sphi 0, %s25
      %s28 = sphi 0, %s26
      %s38 = sphi 0, %s40
      %s41 = sphi 0, %s38
      %s42 = sphi 0, %s41
      %s58 = sphi 0, %s42
      %s62 = sphi 0, %s62
      %s64 = sphi 0, %s62
      %s65 = sphi 0, %s64
      %s79 = sphi 0, %s65
      %s83 = sphi 0, %s83
      %s85 = sphi 0, %s83
      %s86 = sphi 0, %s85
      %s100 = sphi 0, %s86
      %s106 = sphi 0, %s108
      %s109 = sphi 0, %s106
      %s110 = sphi 0, %s109
      %s126 = sphi 0, %s110
      %s132 = sphi 0, %s134
      %s135 = sphi 0, %s132
      %s136 = sphi 0, %s135
      %s152 = sphi 0, %s136
      %s158 = sphi 0, %s160
      %s161 = sphi 0, %s158
      %s162 = sphi 0, %s161
      %s178 = sphi 0, %s162
      %s182 = sphi 0, %s182
      %s184 = sphi 0, %s182
      %s185 = sphi 0, %s184
      %s199 = sphi 0, %s185
      %s205 = sphi 0, %s207
      %s208 = sphi 0, %s205
      %s209 = sphi 0, %s208
      %s225 = sphi 0, %s209
    $region4: #{resnet_block.1} parent=1 // loop_header_branch
      %19 = sbr.rel (%p17) target = $region8
    $region5: #{resnet_block.1} parent=1 // loop_body
      %s21 = ssub.s32 %s16, 1
      %s22 = ssub.s32 %s16, 2
      %s29 = sadd.s32 1, %s24
      %p30 = scmp.ge.s32.totalorder %s29, 1
      %s31 = scalar_select %p30, 0, %s29
      %s32 = sadd.s32 1, %s23
      %s33 = scalar_select %p30, %s32, %s23
      %p34 = scmp.ge.s32.totalorder %s33, 2
      %s35 = scalar_select %p34, 0, %s33
      %s36 = ssub.s32 %s23, %s35
      %p37 = scmp.eq.s32.totalorder %s36, 0
      %s39 = sadd.s32 %s38, 1
      %s40 = scalar_select %p37, %s38, %s39
      %p43 = pneg %p37
      %p44 = scmp.eq.s32.totalorder %s16, 1
      %p45 = por %p43, %p44
      %p46 = scmp.ne.s32.totalorder %s38, %s41
      %p47 = scmp.eq.s32.totalorder %s16, 0
      %p48 = por %p46, %p47
      %p49 = scmp.ne.s32.totalorder %s38, %s41
      %p50 = scmp.eq.s32.totalorder %s21, 1
      %p51 = por %p49, %p50
      %p52 = scmp.ne.s32.totalorder %s41, %s42
      %p53 = scmp.eq.s32.totalorder %s21, 0
      %p54 = por %p52, %p53
      %p55 = scmp.ne.s32.totalorder %s41, %s42
      %p56 = scmp.eq.s32.totalorder %s22, 1
      %p57 = por %p55, %p56
      %p59 = scmp.ne.s32.totalorder %s42, %s58
      %p60 = scmp.eq.s32.totalorder %s22, 0
      %p61 = por %p59, %p60
      %s63 = sadd.s32 %s62, 1
      %p66 = scmp.eq.s32.totalorder %s16, 1
      %p67 = scmp.ne.s32.totalorder %s62, %s64
      %p68 = scmp.eq.s32.totalorder %s16, 0
      %p69 = por %p67, %p68
      %p70 = scmp.ne.s32.totalorder %s62, %s64
      %p71 = scmp.eq.s32.totalorder %s21, 1
      %p72 = por %p70, %p71
      %p73 = scmp.ne.s32.totalorder %s64, %s65
      %p74 = scmp.eq.s32.totalorder %s21, 0
      %p75 = por %p73, %p74
      %p76 = scmp.ne.s32.totalorder %s64, %s65
      %p77 = scmp.eq.s32.totalorder %s22, 1
      %p78 = por %p76, %p77
      %p80 = scmp.ne.s32.totalorder %s65, %s79
      %p81 = scmp.eq.s32.totalorder %s22, 0
      %p82 = por %p80, %p81
      %s84 = sadd.s32 %s83, 1
      %p87 = scmp.eq.s32.totalorder %s16, 1
      %p88 = scmp.ne.s32.totalorder %s83, %s85
      %p89 = scmp.eq.s32.totalorder %s16, 0
      %p90 = por %p88, %p89
      %p91 = scmp.ne.s32.totalorder %s83, %s85
      %p92 = scmp.eq.s32.totalorder %s21, 1
      %p93 = por %p91, %p92
      %p94 = scmp.ne.s32.totalorder %s85, %s86
      %p95 = scmp.eq.s32.totalorder %s21, 0
      %p96 = por %p94, %p95
      %p97 = scmp.ne.s32.totalorder %s85, %s86
      %p98 = scmp.eq.s32.totalorder %s22, 1
      %p99 = por %p97, %p98
      %p101 = scmp.ne.s32.totalorder %s86, %s100
      %p102 = scmp.eq.s32.totalorder %s22, 0
      %p103 = por %p101, %p102
      %s104 = ssub.s32 %s24, %s31
      %p105 = scmp.eq.s32.totalorder %s104, 0
      %s107 = sadd.s32 %s106, 1
      %s108 = scalar_select %p105, %s106, %s107
      %p111 = pneg %p105
      %p112 = scmp.eq.s32.totalorder %s16, 1
      %p113 = por %p111, %p112
      %p114 = scmp.ne.s32.totalorder %s106, %s109
      %p115 = scmp.eq.s32.totalorder %s16, 0
      %p116 = por %p114, %p115
      %p117 = scmp.ne.s32.totalorder %s106, %s109
      %p118 = scmp.eq.s32.totalorder %s21, 1
      %p119 = por %p117, %p118
      %p120 = scmp.ne.s32.totalorder %s109, %s110
      %p121 = scmp.eq.s32.totalorder %s21, 0
      %p122 = por %p120, %p121
      %p123 = scmp.ne.s32.totalorder %s109, %s110
      %p124 = scmp.eq.s32.totalorder %s22, 1
      %p125 = por %p123, %p124
      %p127 = scmp.ne.s32.totalorder %s110, %s126
      %p128 = scmp.eq.s32.totalorder %s22, 0
      %p129 = por %p127, %p128
      %s130 = ssub.s32 %s24, %s31
      %p131 = scmp.eq.s32.totalorder %s130, 0
      %s133 = sadd.s32 %s132, 1
      %s134 = scalar_select %p131, %s132, %s133
      %p137 = pneg %p131
      %p138 = scmp.eq.s32.totalorder %s16, 1
      %p139 = por %p137, %p138
      %p140 = scmp.ne.s32.totalorder %s132, %s135
      %p141 = scmp.eq.s32.totalorder %s16, 0
      %p142 = por %p140, %p141
      %p143 = scmp.ne.s32.totalorder %s132, %s135
      %p144 = scmp.eq.s32.totalorder %s21, 1
      %p145 = por %p143, %p144
      %p146 = scmp.ne.s32.totalorder %s135, %s136
      %p147 = scmp.eq.s32.totalorder %s21, 0
      %p148 = por %p146, %p147
      %p149 = scmp.ne.s32.totalorder %s135, %s136
      %p150 = scmp.eq.s32.totalorder %s22, 1
      %p151 = por %p149, %p150
      %p153 = scmp.ne.s32.totalorder %s136, %s152
      %p154 = scmp.eq.s32.totalorder %s22, 0
      %p155 = por %p153, %p154
      %s156 = ssub.s32 %s24, %s31
      %p157 = scmp.eq.s32.totalorder %s156, 0
      %s159 = sadd.s32 %s158, 1
      %s160 = scalar_select %p157, %s158, %s159
      %p163 = pneg %p157
      %p164 = scmp.eq.s32.totalorder %s16, 1
      %p165 = por %p163, %p164
      %p166 = scmp.ne.s32.totalorder %s158, %s161
      %p167 = scmp.eq.s32.totalorder %s16, 0
      %p168 = por %p166, %p167
      %p169 = scmp.ne.s32.totalorder %s158, %s161
      %p170 = scmp.eq.s32.totalorder %s21, 1
      %p171 = por %p169, %p170
      %p172 = scmp.ne.s32.totalorder %s161, %s162
      %p173 = scmp.eq.s32.totalorder %s21, 0
      %p174 = por %p172, %p173
      %p175 = scmp.ne.s32.totalorder %s161, %s162
      %p176 = scmp.eq.s32.totalorder %s22, 1
      %p177 = por %p175, %p176
      %p179 = scmp.ne.s32.totalorder %s162, %s178
      %p180 = scmp.eq.s32.totalorder %s22, 0
      %p181 = por %p179, %p180
      %s183 = sadd.s32 %s182, 1
      %p186 = scmp.eq.s32.totalorder %s16, 1
      %p187 = scmp.ne.s32.totalorder %s182, %s184
      %p188 = scmp.eq.s32.totalorder %s16, 0
      %p189 = por %p187, %p188
      %p190 = scmp.ne.s32.totalorder %s182, %s184
      %p191 = scmp.eq.s32.totalorder %s21, 1
      %p192 = por %p190, %p191
      %p193 = scmp.ne.s32.totalorder %s184, %s185
      %p194 = scmp.eq.s32.totalorder %s21, 0
      %p195 = por %p193, %p194
      %p196 = scmp.ne.s32.totalorder %s184, %s185
      %p197 = scmp.eq.s32.totalorder %s22, 1
      %p198 = por %p196, %p197
      %p200 = scmp.ne.s32.totalorder %s185, %s199
      %p201 = scmp.eq.s32.totalorder %s22, 0
      %p202 = por %p200, %p201
      %s203 = ssub.s32 %s23, %s35
      %p204 = scmp.eq.s32.totalorder %s203, 0
      %s206 = sadd.s32 %s205, 1
      %s207 = scalar_select %p204, %s205, %s206
      %p210 = pneg %p204
      %p211 = scmp.eq.s32.totalorder %s16, 1
      %p212 = por %p210, %p211
      %p213 = scmp.ne.s32.totalorder %s205, %s208
      %p214 = scmp.eq.s32.totalorder %s16, 0
      %p215 = por %p213, %p214
      %p216 = scmp.ne.s32.totalorder %s205, %s208
      %p217 = scmp.eq.s32.totalorder %s21, 1
      %p218 = por %p216, %p217
      %p219 = scmp.ne.s32.totalorder %s208, %s209
      %p220 = scmp.eq.s32.totalorder %s21, 0
      %p221 = por %p219, %p220
      %p222 = scmp.ne.s32.totalorder %s208, %s209
      %p223 = scmp.eq.s32.totalorder %s22, 1
      %p224 = por %p222, %p223
      %p226 = scmp.ne.s32.totalorder %s209, %s225
      %p227 = scmp.eq.s32.totalorder %s22, 0
      %p228 = por %p226, %p227
      %p229 = scmp.le.s32.totalorder 1, %s16
      %p230 = scmp.lt.s32.totalorder %s16, 3
      %p231 = pnand %p229, %p230
      %p232 = pneg %p231
      // Predicated region
      $region9: #{resnet_block.1} parent=5 // pred_check
        _
      $region10: #{resnet_block.1} parent=5 // pred_check_branch
        %234 = sbr.rel (%p231) target = $region12
      $region11: #{resnet_block.1} parent=5 // pred_region
        %s235 = ssub.s32 %s16, 1
        // Predicated region
        $region13: #{resnet_block.1} parent=11 // pred_check
          %p236 = pneg %p75
        $region14: #{resnet_block.1} parent=11 // pred_check_branch
          %238 = sbr.rel (%p236) target = $region16
        $region15: #{resnet_block.1} parent=11 // pred_region
          _
        $region16: #{resnet_block.1} parent=11 // pred_fallthru
          _
        // Predicated region
        $region17: #{resnet_block.1} parent=11 // pred_check
          %p239 = pneg %p96
        $region18: #{resnet_block.1} parent=11 // pred_check_branch
          %241 = sbr.rel (%p239) target = $region20
        $region19: #{resnet_block.1} parent=11 // pred_region
          _
        $region20: #{resnet_block.1} parent=11 // pred_fallthru
          _
        // Predicated region
        $region21: #{resnet_block.1} parent=11 // pred_check
          %p242 = pneg %p122
        $region22: #{resnet_block.1} parent=11 // pred_check_branch
          %244 = sbr.rel (%p242) target = $region24
        $region23: #{resnet_block.1} parent=11 // pred_region
          %s245 = smul.u32 4, %s26
          %p246 = scmp.lt.s32.totalorder %s245, 3
          %s247 = scalar_select %p246, %s245, 3
          %s248 = smul.addr %s247, 4
          %s249 = scalar_lea.vmem %s3, %s248
          %s250 = smul.u32 4, %s26
        $region24: #{resnet_block.1} parent=11 // pred_fallthru
          _
        // Predicated region
        $region25: #{resnet_block.1} parent=11 // pred_check
          %p251 = pneg %p148
        $region26: #{resnet_block.1} parent=11 // pred_check_branch
          %253 = sbr.rel (%p251) target = $region28
        $region27: #{resnet_block.1} parent=11 // pred_region
          %s254 = smul.u32 4, %s26
          %p255 = scmp.lt.s32.totalorder %s254, 3
          %s256 = scalar_select %p255, %s254, 3
          %s257 = scalar_lea.vmem %s4, %s256
          %s258 = smul.u32 4, %s26
        $region28: #{resnet_block.1} parent=11 // pred_fallthru
          _
        // Predicated region
        $region29: #{resnet_block.1} parent=11 // pred_check
          %p259 = pneg %p174
        $region30: #{resnet_block.1} parent=11 // pred_check_branch
          %261 = sbr.rel (%p259) target = $region32
        $region31: #{resnet_block.1} parent=11 // pred_region
          %s262 = smul.u32 64, %s26
          %p263 = scmp.lt.s32.totalorder %s262, 63
          %s264 = scalar_select %p263, %s262, 63
          %s265 = smul.addr %s264, 4
          %s266 = scalar_lea.vmem %s5, %s265
          %s267 = smul.u32 64, %s26
        $region32: #{resnet_block.1} parent=11 // pred_fallthru
          _
        // Predicated region
        $region33: #{resnet_block.1} parent=11 // pred_check
          %p268 = pneg %p195
        $region34: #{resnet_block.1} parent=11 // pred_check_branch
          %270 = sbr.rel (%p268) target = $region36
        $region35: #{resnet_block.1} parent=11 // pred_region
          _
        $region36: #{resnet_block.1} parent=11 // pred_fallthru
          _
      $region12: #{resnet_block.1} parent=5 // pred_fallthru
        _
      %p271 = scmp.lt.s32.totalorder %s16, 2
      // Predicated region
      $region37: #{resnet_block.1} parent=5 // pred_check
        %p272 = pneg %p271
      $region38: #{resnet_block.1} parent=5 // pred_check_branch
        %274 = sbr.rel (%p272) target = $region40
      $region39: #{resnet_block.1} parent=5 // pred_region
        // Predicated region
        $region41: #{resnet_block.1} parent=39 // pred_check
          %p275 = pneg %p48
        $region42: #{resnet_block.1} parent=39 // pred_check_branch
          %277 = sbr.rel (%p275) target = $region44
        $region43: #{resnet_block.1} parent=39 // pred_region
          %p278 = scmp.lt.s32.totalorder %s23, 1
          %s279 = scalar_select %p278, %s23, 1
          %s280 = smul.addr %s279, 8
          %s281 = scalar_lea.vmem %s0, %s280
        $region44: #{resnet_block.1} parent=39 // pred_fallthru
          _
      $region40: #{resnet_block.1} parent=5 // pred_fallthru
        _
      %p282 = scmp.le.s32.totalorder 1, %s16
      %p283 = scmp.lt.s32.totalorder %s16, 3
      %p284 = pnand %p282, %p283
      %p285 = pneg %p284
      // Predicated region
      $region45: #{resnet_block.1} parent=5 // pred_check
        _
      $region46: #{resnet_block.1} parent=5 // pred_check_branch
        %287 = sbr.rel (%p284) target = $region48
      $region47: #{resnet_block.1} parent=5 // pred_region
        %s288 = ssub.s32 %s16, 1
        %p289 = scmp.lt.s32.totalorder %s25, 1
        %s290 = scalar_select %p289, %s25, 1
        %s291 = smul.addr %s290, 8
        %s292 = scalar_lea.vmem %s0, %s291
        %p293 = pneg %p54
        %p294 = pneg %p51
        %p295 = pneg %p75
        %p296 = pneg %p72
        %p297 = pneg %p96
        %p298 = pneg %p93
        %s299 = smul.u32 4, %s26
        %p300 = scmp.lt.s32.totalorder %s299, 3
        %s301 = scalar_select %p300, %s299, 3
        %s302 = smul.addr %s301, 4
        %s303 = scalar_lea.vmem %s3, %s302
        %p304 = pneg %p122
        %p305 = pneg %p119
        %s306 = smul.u32 4, %s26
        %p307 = scmp.lt.s32.totalorder %s306, 3
        %s308 = scalar_select %p307, %s306, 3
        %s309 = scalar_lea.vmem %s4, %s308
        %p310 = pneg %p148
        %p311 = pneg %p145
        %s312 = smul.u32 64, %s26
        %p313 = scmp.lt.s32.totalorder %s312, 63
        %s314 = scalar_select %p313, %s312, 63
        %s315 = smul.addr %s314, 4
        %s316 = scalar_lea.vmem %s5, %s315
        %p317 = pneg %p174
        %p318 = pneg %p171
        %p319 = pneg %p195
        %p320 = pneg %p192
        %p321 = pneg %p221
        %p322 = pneg %p218
        %s323 = sand.u32 %s208, 1
        %s324 = scalar_lea.sflag [#allocation5], %s323
        %s325 = sand.u32 %s208, 1
        %s326 = smul.addr %s325, 8
        %s327 = scalar_lea.vmem [#allocation4], %s326
        %p328 = scmp.lt.s32.totalorder %s25, 1
        %s329 = scalar_select %p328, %s25, 1
        %s330 = smul.addr %s329, 8
        %s331 = scalar_lea.vmem %s0, %s330
        %s332 = smul.u32 4, %s26
        %p333 = scmp.lt.s32.totalorder %s332, 3
        %s334 = scalar_select %p333, %s332, 3
        %s335 = smul.addr %s334, 4
        %s336 = scalar_lea.vmem %s3, %s335
        %s337 = smul.u32 4, %s26
        %s338 = smul.u32 4, %s26
        %p339 = scmp.lt.s32.totalorder %s338, 3
        %s340 = scalar_select %p339, %s338, 3
        %s341 = scalar_lea.vmem %s4, %s340
        %s342 = smul.u32 4, %s26
        %s343 = smul.u32 64, %s26
        %p344 = scmp.lt.s32.totalorder %s343, 63
        %s345 = scalar_select %p344, %s343, 63
        %s346 = smul.addr %s345, 4
        %s347 = scalar_lea.vmem %s5, %s346
        %s348 = smul.u32 64, %s26
        %p350 = scmp.eq.s32.totalorder %s26, 0
        // Predicated region
        $region49: #{resnet_block.1} parent=47 // pred_check
          %p351 = pneg %p350
        $region50: #{resnet_block.1} parent=47 // pred_check_branch
          %353 = sbr.rel (%p351) target = $region52
        $region51: #{resnet_block.1} parent=47 // pred_region
          %v354 = vld [vmem:[%s331] sm:$0xff]
          %355 = vadd.xlane.f32.xlu0 %v354
          %v356 = vpop.xlane.xlu0 %355
          %v357 = vmul.f32 %v354, %v354
          %358 = vadd.xlane.f32.xlu0 %v357
          %v359 = vpop.xlane.xlu0 %358
          %v360 = vmul.f32 %v356, 0.0078125
          %v361 = vmul.f32 %v359, 0.0078125
          %v362 = vmul.f32 %v360, %v360
          %v363 = vsub.f32 %v361, %v362
          %v364 = vsub.f32 %v354, %v360
          %v365 = vadd.f32 %v363, 1e-05
          %v366 = vrsqrt.pop %v365
          %v367 = vmul.f32 %v364, %v366
          %v368 = vld [vmem:[%s1] sm:$0x1]
          %v370 = vlaneseq
          %v371 = vshrl.u32 %v370, 7
          %v372 = vsub.s32 0, %v371
          %v373 = vrot.slane %v368, %v372
          %v375 = vmul.f32 %v367, %v373
          %v376 = vld [vmem:[%s2] sm:$0x1]
          %v378 = vlaneseq
          %v379 = vshrl.u32 %v378, 7
          %v380 = vsub.s32 0, %v379
          %v381 = vrot.slane %v376, %v380
          %v383 = vadd.f32 %v375, %v381
          %v384 = vpack.c.bf16 %v383, %v383
          %385 = vst [vmem:[#allocation2] sm:$0xf] %v384
          %386 = vst [vmem:[#allocation3] sm:$0xff] 0.0
        $region52: #{resnet_block.1} parent=47 // pred_fallthru
          _
        %v387 = vld [vmem:[#allocation2] sm:$0xf]
        %v388 = vld [vmem:[%s336] sm:$0xff]
        %v389 = vld [vmem:[%s336 + $0x8] sm:$0xff]
        %v390 = vld [vmem:[%s336 + $0x10] sm:$0xff]
        %v391 = vld [vmem:[%s336 + $0x18] sm:$0xff]
        %v392 = vld [vmem:[%s336 + $0x20] sm:$0xff]
        %v393 = vld [vmem:[%s336 + $0x28] sm:$0xff]
        %v394 = vld [vmem:[%s336 + $0x30] sm:$0xff]
        %v395 = vld [vmem:[%s336 + $0x38] sm:$0xff]
        %v396 = vld [vmem:[%s336 + $0x40] sm:$0xff]
        %v397 = vld [vmem:[%s336 + $0x48] sm:$0xff]
        %v398 = vld [vmem:[%s336 + $0x50] sm:$0xff]
        %v399 = vld [vmem:[%s336 + $0x58] sm:$0xff]
        %v400 = vld [vmem:[%s336 + $0x60] sm:$0xff]
        %v401 = vld [vmem:[%s336 + $0x68] sm:$0xff]
        %v402 = vld [vmem:[%s336 + $0x70] sm:$0xff]
        %v403 = vld [vmem:[%s336 + $0x78] sm:$0xff]
        %v404 = vld [vmem:[%s336 + $0x80] sm:$0xff]
        %v405 = vld [vmem:[%s336 + $0x88] sm:$0xff]
        %v406 = vld [vmem:[%s336 + $0x90] sm:$0xff]
        %v407 = vld [vmem:[%s336 + $0x98] sm:$0xff]
        %v408 = vld [vmem:[%s336 + $0xa0] sm:$0xff]
        %v409 = vld [vmem:[%s336 + $0xa8] sm:$0xff]
        %v410 = vld [vmem:[%s336 + $0xb0] sm:$0xff]
        %v411 = vld [vmem:[%s336 + $0xb8] sm:$0xff]
        %v412 = vld [vmem:[%s336 + $0xc0] sm:$0xff]
        %v413 = vld [vmem:[%s336 + $0xc8] sm:$0xff]
        %v414 = vld [vmem:[%s336 + $0xd0] sm:$0xff]
        %v415 = vld [vmem:[%s336 + $0xd8] sm:$0xff]
        %v416 = vld [vmem:[%s336 + $0xe0] sm:$0xff]
        %v417 = vld [vmem:[%s336 + $0xe8] sm:$0xff]
        %v418 = vld [vmem:[%s336 + $0xf0] sm:$0xff]
        %v419 = vld [vmem:[%s336 + $0xf8] sm:$0xff]
        %v420 = vld [vmem:[%s341] sm:$0xf]
        %v422 = vlaneseq
        %v423 = vshrl.u32 %v422, 7
        %v424 = vsub.s32 0, %v423
        %v425 = vrot.slane %v420, %v424
        %v426 = vlaneseq
        %v427 = vshrl.u32 %v426, 7
        %v428 = vsub.s32 1, %v427
        %v429 = vrot.slane %v420, %v428
        %v430 = vlaneseq
        %v431 = vshrl.u32 %v430, 7
        %v432 = vsub.s32 2, %v431
        %v433 = vrot.slane %v420, %v432
        %v434 = vlaneseq
        %v435 = vshrl.u32 %v434, 7
        %v436 = vsub.s32 3, %v435
        %v437 = vrot.slane %v420, %v436
        %v474 = vunpack.c.l.b16 %v388
        %v475 = vunpack.c.h.b16 %v388
        %v476 = vunpack.c.l.b16 %v389
        %v477 = vunpack.c.h.b16 %v389
        %v478 = vunpack.c.l.b16 %v390
        %v479 = vunpack.c.h.b16 %v390
        %v480 = vunpack.c.l.b16 %v391
        %v481 = vunpack.c.h.b16 %v391
        %v482 = vunpack.c.l.b16 %v392
        %v483 = vunpack.c.h.b16 %v392
        %v484 = vunpack.c.l.b16 %v393
        %v485 = vunpack.c.h.b16 %v393
        %v486 = vunpack.c.l.b16 %v394
        %v487 = vunpack.c.h.b16 %v394
        %v488 = vunpack.c.l.b16 %v395
        %v489 = vunpack.c.h.b16 %v395
        %v490 = vunpack.c.l.b16 %v396
        %v491 = vunpack.c.h.b16 %v396
        %v492 = vunpack.c.l.b16 %v397
        %v493 = vunpack.c.h.b16 %v397
        %v494 = vunpack.c.l.b16 %v398
        %v495 = vunpack.c.h.b16 %v398
        %v496 = vunpack.c.l.b16 %v399
        %v497 = vunpack.c.h.b16 %v399
        %v498 = vunpack.c.l.b16 %v400
        %v499 = vunpack.c.h.b16 %v400
        %v500 = vunpack.c.l.b16 %v401
        %v501 = vunpack.c.h.b16 %v401
        %v502 = vunpack.c.l.b16 %v402
        %v503 = vunpack.c.h.b16 %v402
        %v504 = vunpack.c.l.b16 %v403
        %v505 = vunpack.c.h.b16 %v403
        %v506 = vunpack.c.l.b16 %v404
        %v507 = vunpack.c.h.b16 %v404
        %v508 = vunpack.c.l.b16 %v405
        %v509 = vunpack.c.h.b16 %v405
        %v510 = vunpack.c.l.b16 %v406
        %v511 = vunpack.c.h.b16 %v406
        %v512 = vunpack.c.l.b16 %v407
        %v513 = vunpack.c.h.b16 %v407
        %v514 = vunpack.c.l.b16 %v408
        %v515 = vunpack.c.h.b16 %v408
        %v516 = vunpack.c.l.b16 %v409
        %v517 = vunpack.c.h.b16 %v409
        %v518 = vunpack.c.l.b16 %v410
        %v519 = vunpack.c.h.b16 %v410
        %v520 = vunpack.c.l.b16 %v411
        %v521 = vunpack.c.h.b16 %v411
        %v522 = vunpack.c.l.b16 %v412
        %v523 = vunpack.c.h.b16 %v412
        %v524 = vunpack.c.l.b16 %v413
        %v525 = vunpack.c.h.b16 %v413
        %v526 = vunpack.c.l.b16 %v414
        %v527 = vunpack.c.h.b16 %v414
        %v528 = vunpack.c.l.b16 %v415
        %v529 = vunpack.c.h.b16 %v415
        %v530 = vunpack.c.l.b16 %v416
        %v531 = vunpack.c.h.b16 %v416
        %v532 = vunpack.c.l.b16 %v417
        %v533 = vunpack.c.h.b16 %v417
        %v534 = vunpack.c.l.b16 %v418
        %v535 = vunpack.c.h.b16 %v418
        %v536 = vunpack.c.l.b16 %v419
        %v537 = vunpack.c.h.b16 %v419
        %v538 = vpack.c.b16 %v478, %v474
        %v539 = vpack.c.b16 %v479, %v475
        %v540 = vpack.c.b16 %v480, %v476
        %v541 = vpack.c.b16 %v481, %v477
        %v542 = vpack.c.b16 %v486, %v482
        %v543 = vpack.c.b16 %v487, %v483
        %v544 = vpack.c.b16 %v488, %v484
        %v545 = vpack.c.b16 %v489, %v485
        %v546 = vpack.c.b16 %v494, %v490
        %v547 = vpack.c.b16 %v495, %v491
        %v548 = vpack.c.b16 %v496, %v492
        %v549 = vpack.c.b16 %v497, %v493
        %v550 = vpack.c.b16 %v502, %v498
        %v551 = vpack.c.b16 %v503, %v499
        %v552 = vpack.c.b16 %v504, %v500
        %v553 = vpack.c.b16 %v505, %v501
        %v554 = vpack.c.b16 %v510, %v506
        %v555 = vpack.c.b16 %v511, %v507
        %v556 = vpack.c.b16 %v512, %v508
        %v557 = vpack.c.b16 %v513, %v509
        %v558 = vpack.c.b16 %v518, %v514
        %v559 = vpack.c.b16 %v519, %v515
        %v560 = vpack.c.b16 %v520, %v516
        %v561 = vpack.c.b16 %v521, %v517
        %v562 = vpack.c.b16 %v526, %v522
        %v563 = vpack.c.b16 %v527, %v523
        %v564 = vpack.c.b16 %v528, %v524
        %v565 = vpack.c.b16 %v529, %v525
        %v566 = vpack.c.b16 %v534, %v530
        %v567 = vpack.c.b16 %v535, %v531
        %v568 = vpack.c.b16 %v536, %v532
        %v569 = vpack.c.b16 %v537, %v533
        %602 = vmatprep.subr.bf16.mxu0 %v539
        %603 = vmatpush1.bf16.msra.mxu0 %v538
        %604 = vmatprep.subr.bf16.mxu0 %v543
        %605 = vmatpush1.bf16.msra.mxu0 %v542
        %606 = vmatprep.subr.bf16.mxu0 %v547
        %607 = vmatpush1.bf16.msra.mxu0 %v546
        %608 = vmatprep.subr.bf16.mxu0 %v551
        %609 = vmatpush1.bf16.msra.mxu0 %v550
        %610 = vmatprep.subr.bf16.mxu0 %v555
        %611 = vmatpush1.bf16.msra.mxu0 %v554
        %612 = vmatprep.subr.bf16.mxu0 %v559
        %613 = vmatpush1.bf16.msra.mxu0 %v558
        %614 = vmatprep.subr.bf16.mxu0 %v563
        %615 = vmatpush1.bf16.msra.mxu0 %v562
        %616 = vmatprep.subr.bf16.mxu0 %v567
        %617 = vmatpush1.bf16.msra.mxu0 %v566
        %618 = vmatprep.subr.bf16.mxu0 0
        %619 = vmatpush1.bf16.msra.mxu0 0
        %620 = vmatprep.subr.bf16.mxu0 0
        %621 = vmatpush1.bf16.msra.mxu0 0
        %622 = vmatprep.subr.bf16.mxu0 0
        %623 = vmatpush1.bf16.msra.mxu0 0
        %624 = vmatprep.subr.bf16.mxu0 0
        %625 = vmatpush1.bf16.msra.mxu0 0
        %626 = vmatprep.subr.bf16.mxu0 0
        %627 = vmatpush1.bf16.msra.mxu0 0
        %628 = vmatprep.subr.bf16.mxu0 0
        %629 = vmatpush1.bf16.msra.mxu0 0
        %630 = vmatprep.subr.bf16.mxu0 0
        %631 = vmatpush1.bf16.msra.mxu0 0
        %632 = vmatprep.subr.bf16.mxu0 0
        %633 = vmatpush1.bf16.msra.mxu0 0
        %634 = vmatprep.mubr.bf16.mxu0 0
        %635 = vmatmul.mubr.bf16.gmra.mrb[0].mxu0 %v387
        %v636 = vpop.f32.mrb[0].mxu0
        %v637 = vadd.f32 %v425, %v636
        %v638 = vpop.f32.mrb[0].mxu0
        %v639 = vadd.f32 %v429, %v638
        %v640 = vpop.f32.mrb[0].mxu0
        %v641 = vpop.f32.mrb[0].mxu0
        %642 = vdwg.mxu0
        %643 = vmatprep.subr.bf16.mxu0 %v541
        %644 = vmatpush1.bf16.msra.mxu0 %v540
        %645 = vmatprep.subr.bf16.mxu0 %v545
        %646 = vmatpush1.bf16.msra.mxu0 %v544
        %647 = vmatprep.subr.bf16.mxu0 %v549
        %648 = vmatpush1.bf16.msra.mxu0 %v548
        %649 = vmatprep.subr.bf16.mxu0 %v553
        %650 = vmatpush1.bf16.msra.mxu0 %v552
        %651 = vmatprep.subr.bf16.mxu0 %v557
        %652 = vmatpush1.bf16.msra.mxu0 %v556
        %653 = vmatprep.subr.bf16.mxu0 %v561
        %654 = vmatpush1.bf16.msra.mxu0 %v560
        %655 = vmatprep.subr.bf16.mxu0 %v565
        %656 = vmatpush1.bf16.msra.mxu0 %v564
        %657 = vmatprep.subr.bf16.mxu0 %v569
        %658 = vmatpush1.bf16.msra.mxu0 %v568
        %659 = vmatprep.subr.bf16.mxu0 0
        %660 = vmatpush1.bf16.msra.mxu0 0
        %661 = vmatprep.subr.bf16.mxu0 0
        %662 = vmatpush1.bf16.msra.mxu0 0
        %663 = vmatprep.subr.bf16.mxu0 0
        %664 = vmatpush1.bf16.msra.mxu0 0
        %665 = vmatprep.subr.bf16.mxu0 0
        %666 = vmatpush1.bf16.msra.mxu0 0
        %667 = vmatprep.subr.bf16.mxu0 0
        %668 = vmatpush1.bf16.msra.mxu0 0
        %669 = vmatprep.subr.bf16.mxu0 0
        %670 = vmatpush1.bf16.msra.mxu0 0
        %671 = vmatprep.subr.bf16.mxu0 0
        %672 = vmatpush1.bf16.msra.mxu0 0
        %673 = vmatprep.subr.bf16.mxu0 0
        %674 = vmatpush1.bf16.msra.mxu0 0
        %675 = vmatprep.mubr.bf16.mxu0 0
        %676 = vmatmul.mubr.bf16.gmra.mrb[0].mxu0 %v387
        %v677 = vpop.f32.mrb[0].mxu0
        %v678 = vadd.f32 %v433, %v677
        %v679 = vpop.f32.mrb[0].mxu0
        %v680 = vadd.f32 %v437, %v679
        %v681 = vpop.f32.mrb[0].mxu0
        %v682 = vpop.f32.mrb[0].mxu0
        %683 = vdwg.mxu0
        %v684 = vmax.f32 %v637, 0.0
        %v685 = vmax.f32 %v639, 0.0
        %v686 = vmax.f32 %v678, 0.0
        %v687 = vmax.f32 %v680, 0.0
        %v688 = vld [vmem:[#allocation3] sm:$0xff]
        %v689 = vpack.c.bf16 %v684, %v684
        %v690 = vpack.c.bf16 %v685, %v685
        %v691 = vpack.c.bf16 %v686, %v686
        %v692 = vpack.c.bf16 %v687, %v687
        %v693 = vld [vmem:[%s347] sm:$0xf]
        %v694 = vld [vmem:[%s347 + $0x4] sm:$0xf]
        %v695 = vld [vmem:[%s347 + $0x8] sm:$0xf]
        %v696 = vld [vmem:[%s347 + $0xc] sm:$0xf]
        %v697 = vld [vmem:[%s347 + $0x10] sm:$0xf]
        %v698 = vld [vmem:[%s347 + $0x14] sm:$0xf]
        %v699 = vld [vmem:[%s347 + $0x18] sm:$0xf]
        %v700 = vld [vmem:[%s347 + $0x1c] sm:$0xf]
        %v701 = vld [vmem:[%s347 + $0x20] sm:$0xf]
        %v702 = vld [vmem:[%s347 + $0x24] sm:$0xf]
        %v703 = vld [vmem:[%s347 + $0x28] sm:$0xf]
        %v704 = vld [vmem:[%s347 + $0x2c] sm:$0xf]
        %v705 = vld [vmem:[%s347 + $0x30] sm:$0xf]
        %v706 = vld [vmem:[%s347 + $0x34] sm:$0xf]
        %v707 = vld [vmem:[%s347 + $0x38] sm:$0xf]
        %v708 = vld [vmem:[%s347 + $0x3c] sm:$0xf]
        %v709 = vld [vmem:[%s347 + $0x40] sm:$0xf]
        %v710 = vld [vmem:[%s347 + $0x44] sm:$0xf]
        %v711 = vld [vmem:[%s347 + $0x48] sm:$0xf]
        %v712 = vld [vmem:[%s347 + $0x4c] sm:$0xf]
        %v713 = vld [vmem:[%s347 + $0x50] sm:$0xf]
        %v714 = vld [vmem:[%s347 + $0x54] sm:$0xf]
        %v715 = vld [vmem:[%s347 + $0x58] sm:$0xf]
        %v716 = vld [vmem:[%s347 + $0x5c] sm:$0xf]
        %v717 = vld [vmem:[%s347 + $0x60] sm:$0xf]
        %v718 = vld [vmem:[%s347 + $0x64] sm:$0xf]
        %v719 = vld [vmem:[%s347 + $0x68] sm:$0xf]
        %v720 = vld [vmem:[%s347 + $0x6c] sm:$0xf]
        %v721 = vld [vmem:[%s347 + $0x70] sm:$0xf]
        %v722 = vld [vmem:[%s347 + $0x74] sm:$0xf]
        %v723 = vld [vmem:[%s347 + $0x78] sm:$0xf]
        %v724 = vld [vmem:[%s347 + $0x7c] sm:$0xf]
        %v725 = vld [vmem:[%s347 + $0x80] sm:$0xf]
        %v726 = vld [vmem:[%s347 + $0x84] sm:$0xf]
        %v727 = vld [vmem:[%s347 + $0x88] sm:$0xf]
        %v728 = vld [vmem:[%s347 + $0x8c] sm:$0xf]
        %v729 = vld [vmem:[%s347 + $0x90] sm:$0xf]
        %v730 = vld [vmem:[%s347 + $0x94] sm:$0xf]
        %v731 = vld [vmem:[%s347 + $0x98] sm:$0xf]
        %v732 = vld [vmem:[%s347 + $0x9c] sm:$0xf]
        %v733 = vld [vmem:[%s347 + $0xa0] sm:$0xf]
        %v734 = vld [vmem:[%s347 + $0xa4] sm:$0xf]
        %v735 = vld [vmem:[%s347 + $0xa8] sm:$0xf]
        %v736 = vld [vmem:[%s347 + $0xac] sm:$0xf]
        %v737 = vld [vmem:[%s347 + $0xb0] sm:$0xf]
        %v738 = vld [vmem:[%s347 + $0xb4] sm:$0xf]
        %v739 = vld [vmem:[%s347 + $0xb8] sm:$0xf]
        %v740 = vld [vmem:[%s347 + $0xbc] sm:$0xf]
        %v741 = vld [vmem:[%s347 + $0xc0] sm:$0xf]
        %v742 = vld [vmem:[%s347 + $0xc4] sm:$0xf]
        %v743 = vld [vmem:[%s347 + $0xc8] sm:$0xf]
        %v744 = vld [vmem:[%s347 + $0xcc] sm:$0xf]
        %v745 = vld [vmem:[%s347 + $0xd0] sm:$0xf]
        %v746 = vld [vmem:[%s347 + $0xd4] sm:$0xf]
        %v747 = vld [vmem:[%s347 + $0xd8] sm:$0xf]
        %v748 = vld [vmem:[%s347 + $0xdc] sm:$0xf]
        %v749 = vld [vmem:[%s347 + $0xe0] sm:$0xf]
        %v750 = vld [vmem:[%s347 + $0xe4] sm:$0xf]
        %v751 = vld [vmem:[%s347 + $0xe8] sm:$0xf]
        %v752 = vld [vmem:[%s347 + $0xec] sm:$0xf]
        %v753 = vld [vmem:[%s347 + $0xf0] sm:$0xf]
        %v754 = vld [vmem:[%s347 + $0xf4] sm:$0xf]
        %v755 = vld [vmem:[%s347 + $0xf8] sm:$0xf]
        %v756 = vld [vmem:[%s347 + $0xfc] sm:$0xf]
        %v821 = vunpack.c.l.b16 %v693
        %v822 = vunpack.c.l.b16 %v694
        %v823 = vunpack.c.l.b16 %v695
        %v824 = vunpack.c.l.b16 %v696
        %v825 = vunpack.c.l.b16 %v697
        %v826 = vunpack.c.l.b16 %v698
        %v827 = vunpack.c.l.b16 %v699
        %v828 = vunpack.c.l.b16 %v700
        %v829 = vunpack.c.l.b16 %v701
        %v830 = vunpack.c.l.b16 %v702
        %v831 = vunpack.c.l.b16 %v703
        %v832 = vunpack.c.l.b16 %v704
        %v833 = vunpack.c.l.b16 %v705
        %v834 = vunpack.c.l.b16 %v706
        %v835 = vunpack.c.l.b16 %v707
        %v836 = vunpack.c.l.b16 %v708
        %v837 = vunpack.c.l.b16 %v709
        %v838 = vunpack.c.l.b16 %v710
        %v839 = vunpack.c.l.b16 %v711
        %v840 = vunpack.c.l.b16 %v712
        %v841 = vunpack.c.l.b16 %v713
        %v842 = vunpack.c.l.b16 %v714
        %v843 = vunpack.c.l.b16 %v715
        %v844 = vunpack.c.l.b16 %v716
        %v845 = vunpack.c.l.b16 %v717
        %v846 = vunpack.c.l.b16 %v718
        %v847 = vunpack.c.l.b16 %v719
        %v848 = vunpack.c.l.b16 %v720
        %v849 = vunpack.c.l.b16 %v721
        %v850 = vunpack.c.l.b16 %v722
        %v851 = vunpack.c.l.b16 %v723
        %v852 = vunpack.c.l.b16 %v724
        %v853 = vunpack.c.l.b16 %v725
        %v854 = vunpack.c.l.b16 %v726
        %v855 = vunpack.c.l.b16 %v727
        %v856 = vunpack.c.l.b16 %v728
        %v857 = vunpack.c.l.b16 %v729
        %v858 = vunpack.c.l.b16 %v730
        %v859 = vunpack.c.l.b16 %v731
        %v860 = vunpack.c.l.b16 %v732
        %v861 = vunpack.c.l.b16 %v733
        %v862 = vunpack.c.l.b16 %v734
        %v863 = vunpack.c.l.b16 %v735
        %v864 = vunpack.c.l.b16 %v736
        %v865 = vunpack.c.l.b16 %v737
        %v866 = vunpack.c.l.b16 %v738
        %v867 = vunpack.c.l.b16 %v739
        %v868 = vunpack.c.l.b16 %v740
        %v869 = vunpack.c.l.b16 %v741
        %v870 = vunpack.c.l.b16 %v742
        %v871 = vunpack.c.l.b16 %v743
        %v872 = vunpack.c.l.b16 %v744
        %v873 = vunpack.c.l.b16 %v745
        %v874 = vunpack.c.l.b16 %v746
        %v875 = vunpack.c.l.b16 %v747
        %v876 = vunpack.c.l.b16 %v748
        %v877 = vunpack.c.l.b16 %v749
        %v878 = vunpack.c.l.b16 %v750
        %v879 = vunpack.c.l.b16 %v751
        %v880 = vunpack.c.l.b16 %v752
        %v881 = vunpack.c.l.b16 %v753
        %v882 = vunpack.c.l.b16 %v754
        %v883 = vunpack.c.l.b16 %v755
        %v884 = vunpack.c.l.b16 %v756
        %v885 = vpack.c.b16 %v822, %v821
        %v886 = vpack.c.b16 %v824, %v823
        %v887 = vpack.c.b16 %v826, %v825
        %v888 = vpack.c.b16 %v828, %v827
        %v889 = vpack.c.b16 %v830, %v829
        %v890 = vpack.c.b16 %v832, %v831
        %v891 = vpack.c.b16 %v834, %v833
        %v892 = vpack.c.b16 %v836, %v835
        %v893 = vpack.c.b16 %v838, %v837
        %v894 = vpack.c.b16 %v840, %v839
        %v895 = vpack.c.b16 %v842, %v841
        %v896 = vpack.c.b16 %v844, %v843
        %v897 = vpack.c.b16 %v846, %v845
        %v898 = vpack.c.b16 %v848, %v847
        %v899 = vpack.c.b16 %v850, %v849
        %v900 = vpack.c.b16 %v852, %v851
        %v901 = vpack.c.b16 %v854, %v853
        %v902 = vpack.c.b16 %v856, %v855
        %v903 = vpack.c.b16 %v858, %v857
        %v904 = vpack.c.b16 %v860, %v859
        %v905 = vpack.c.b16 %v862, %v861
        %v906 = vpack.c.b16 %v864, %v863
        %v907 = vpack.c.b16 %v866, %v865
        %v908 = vpack.c.b16 %v868, %v867
        %v909 = vpack.c.b16 %v870, %v869
        %v910 = vpack.c.b16 %v872, %v871
        %v911 = vpack.c.b16 %v874, %v873
        %v912 = vpack.c.b16 %v876, %v875
        %v913 = vpack.c.b16 %v878, %v877
        %v914 = vpack.c.b16 %v880, %v879
        %v915 = vpack.c.b16 %v882, %v881
        %v916 = vpack.c.b16 %v884, %v883
        %949 = vmatprep.subr.bf16.mxu0 0
        %950 = vmatpush1.bf16.msra.mxu0 %v885
        %951 = vmatprep.subr.bf16.mxu0 0
        %952 = vmatpush1.bf16.msra.mxu0 %v886
        %953 = vmatprep.subr.bf16.mxu0 0
        %954 = vmatpush1.bf16.msra.mxu0 %v887
        %955 = vmatprep.subr.bf16.mxu0 0
        %956 = vmatpush1.bf16.msra.mxu0 %v888
        %957 = vmatprep.subr.bf16.mxu0 0
        %958 = vmatpush1.bf16.msra.mxu0 %v889
        %959 = vmatprep.subr.bf16.mxu0 0
        %960 = vmatpush1.bf16.msra.mxu0 %v890
        %961 = vmatprep.subr.bf16.mxu0 0
        %962 = vmatpush1.bf16.msra.mxu0 %v891
        %963 = vmatprep.subr.bf16.mxu0 0
        %964 = vmatpush1.bf16.msra.mxu0 %v892
        %965 = vmatprep.subr.bf16.mxu0 0
        %966 = vmatpush1.bf16.msra.mxu0 %v893
        %967 = vmatprep.subr.bf16.mxu0 0
        %968 = vmatpush1.bf16.msra.mxu0 %v894
        %969 = vmatprep.subr.bf16.mxu0 0
        %970 = vmatpush1.bf16.msra.mxu0 %v895
        %971 = vmatprep.subr.bf16.mxu0 0
        %972 = vmatpush1.bf16.msra.mxu0 %v896
        %973 = vmatprep.subr.bf16.mxu0 0
        %974 = vmatpush1.bf16.msra.mxu0 %v897
        %975 = vmatprep.subr.bf16.mxu0 0
        %976 = vmatpush1.bf16.msra.mxu0 %v898
        %977 = vmatprep.subr.bf16.mxu0 0
        %978 = vmatpush1.bf16.msra.mxu0 %v899
        %979 = vmatprep.subr.bf16.mxu0 0
        %980 = vmatpush1.bf16.msra.mxu0 %v900
        %981 = vmatprep.mubr.bf16.mxu0 %v690
        %982 = vmatmul.mubr.bf16.gmra.mrb[0].mxu0 %v689
        %v983 = vpop.f32.mrb[0].mxu0
        %v984 = vadd.f32 0.0, %v983
        %v985 = vpop.f32.mrb[0].mxu0
        %v986 = vpop.f32.mrb[0].mxu0
        %v987 = vpop.f32.mrb[0].mxu0
        %988 = vdwg.mxu0
        %989 = vmatprep.subr.bf16.mxu0 0
        %990 = vmatpush1.bf16.msra.mxu0 %v901
        %991 = vmatprep.subr.bf16.mxu0 0
        %992 = vmatpush1.bf16.msra.mxu0 %v902
        %993 = vmatprep.subr.bf16.mxu0 0
        %994 = vmatpush1.bf16.msra.mxu0 %v903
        %995 = vmatprep.subr.bf16.mxu0 0
        %996 = vmatpush1.bf16.msra.mxu0 %v904
        %997 = vmatprep.subr.bf16.mxu0 0
        %998 = vmatpush1.bf16.msra.mxu0 %v905
        %999 = vmatprep.subr.bf16.mxu0 0
        %1000 = vmatpush1.bf16.msra.mxu0 %v906
        %1001 = vmatprep.subr.bf16.mxu0 0
        %1002 = vmatpush1.bf16.msra.mxu0 %v907
        %1003 = vmatprep.subr.bf16.mxu0 0
        %1004 = vmatpush1.bf16.msra.mxu0 %v908
        %1005 = vmatprep.subr.bf16.mxu0 0
        %1006 = vmatpush1.bf16.msra.mxu0 %v909
        %1007 = vmatprep.subr.bf16.mxu0 0
        %1008 = vmatpush1.bf16.msra.mxu0 %v910
        %1009 = vmatprep.subr.bf16.mxu0 0
        %1010 = vmatpush1.bf16.msra.mxu0 %v911
        %1011 = vmatprep.subr.bf16.mxu0 0
        %1012 = vmatpush1.bf16.msra.mxu0 %v912
        %1013 = vmatprep.subr.bf16.mxu0 0
        %1014 = vmatpush1.bf16.msra.mxu0 %v913
        %1015 = vmatprep.subr.bf16.mxu0 0
        %1016 = vmatpush1.bf16.msra.mxu0 %v914
        %1017 = vmatprep.subr.bf16.mxu0 0
        %1018 = vmatpush1.bf16.msra.mxu0 %v915
        %1019 = vmatprep.subr.bf16.mxu0 0
        %1020 = vmatpush1.bf16.msra.mxu0 %v916
        %1021 = vmatprep.mubr.bf16.mxu0 %v692
        %1022 = vmatmul.mubr.bf16.gmra.mrb[0].mxu0 %v691
        %v1023 = vpop.f32.mrb[0].mxu0
        %v1024 = vadd.f32 %v984, %v1023
        %v1025 = vpop.f32.mrb[0].mxu0
        %v1026 = vpop.f32.mrb[0].mxu0
        %v1027 = vpop.f32.mrb[0].mxu0
        %1028 = vdwg.mxu0
        %v1029 = vadd.f32 %v688, %v1024
        %1030 = vst [vmem:[#allocation3] sm:$0xff] %v1029
        // Predicated region
        $region53: #{resnet_block.1} parent=47 // pred_check
          %p1031 = pneg %p350
        $region54: #{resnet_block.1} parent=47 // pred_check_branch
          %1033 = sbr.rel (%p1031) target = $region56
        $region55: #{resnet_block.1} parent=47 // pred_region
          %v1034 = vld [vmem:[#allocation3] sm:$0xff]
          %v1035 = vld [vmem:[%s6] sm:$0x1]
          %v1037 = vlaneseq
          %v1038 = vshrl.u32 %v1037, 7
          %v1039 = vsub.s32 0, %v1038
          %v1040 = vrot.slane %v1035, %v1039
          %v1042 = vadd.f32 %v1034, %v1040
          %v1043 = vld [vmem:[%s331] sm:$0xff]
          %v1044 = vadd.f32 %v1042, %v1043
          %1045 = vst [vmem:[%s327] sm:$0xff] %v1044
        $region56: #{resnet_block.1} parent=47 // pred_fallthru
          _
        %s1046 = sand.u32 %s208, 1
        %s1047 = scalar_lea.sflag [#allocation5], %s1046
        %s1048 = sand.u32 %s208, 1
        %s1049 = smul.addr %s1048, 8
        %s1050 = scalar_lea.vmem [#allocation4], %s1049
        // Predicated region
        $region57: #{resnet_block.1} parent=47 // pred_check
          %p1051 = pneg %p218
        $region58: #{resnet_block.1} parent=47 // pred_check_branch
          %1053 = sbr.rel (%p1051) target = $region60
        $region59: #{resnet_block.1} parent=47 // pred_region
          %s1055 = ssub.s32 128, 128
          %1056 = vsyncadd %s1047, %s1055
          %s1057 = smul.addr %s25, 128
          %s1058 = scalar_lea.hbm %s7, %s1057
          %s1060 = sshll.u32 %s1050, 4
          %s1061 = int_to_ptr.vmem [resolvable:$true] %s1060
          %1063 = dma.vmem_to_hbm [thread:$0]  %s1061, 128, %s1058, %s1047
        $region60: #{resnet_block.1} parent=47 // pred_fallthru
          _
      $region48: #{resnet_block.1} parent=5 // pred_fallthru
        _
      %p1064 = scmp.le.s32.totalorder 2, %s16
      // Predicated region
      $region61: #{resnet_block.1} parent=5 // pred_check
        %p1065 = pneg %p1064
      $region62: #{resnet_block.1} parent=5 // pred_check_branch
        %1067 = sbr.rel (%p1065) target = $region64
      $region63: #{resnet_block.1} parent=5 // pred_region
        %s1068 = ssub.s32 %s16, 2
        // Predicated region
        $region65: #{resnet_block.1} parent=63 // pred_check
          %p1069 = pneg %p224
        $region66: #{resnet_block.1} parent=63 // pred_check_branch
          %1071 = sbr.rel (%p1069) target = $region68
        $region67: #{resnet_block.1} parent=63 // pred_region
          %s1072 = sand.u32 %s209, 1
          %s1073 = scalar_lea.sflag [#allocation5], %s1072
          %s1074 = sand.u32 %s209, 1
          %s1075 = smul.addr %s1074, 8
          %s1076 = scalar_lea.vmem [#allocation4], %s1075
          %1077 = dma.done %s1073, 128
        $region68: #{resnet_block.1} parent=63 // pred_fallthru
          _
      $region64: #{resnet_block.1} parent=5 // pred_fallthru
        _
    $region6: #{resnet_block.1} parent=1 // loop_footer
      %s20 = sadd.s32 1, %s16
    $region7: #{resnet_block.1} parent=1 // loop_footer_branch
      %15 = sbr.rel target = $region3
    $region8: #{resnet_block.1} parent=1 // loop_exit
      _
    %1078 = vsyncpa [#allocation5], 1
    %s1079 = scalar_lea.sflag [#allocation5], 1
    %1080 = vsyncpa %s1079, 1

</llo_original>
